<compile_context>
chip_gen: v6e
topology: v6e:2x2x1
jax: 0.10.0
libtpu: 0.0.40
codegen_flags: <defaults>
</compile_context>

<pallas_src>
import functools

import jax
import jax.numpy as jnp
from jax.experimental import pallas as pl
from jax.experimental.pallas import tpu as pltpu

LOG_STD_MIN = -5.0
LOG_STD_MAX = 2.0


def _actor_kernel(obs_ref, w1_ref, b1_ref, w2_ref, b2_ref, w3_ref, b3_ref,
                  out_ref):
    action_dim = w3_ref.shape[1] // 2

    # Load weights once; reused by both unrolled half-tiles below.
    w1 = w1_ref[...]
    b1 = b1_ref[...]
    w2 = w2_ref[...]
    b2 = b2_ref[...]
    w3 = w3_ref[...]
    b3 = b3_ref[...]

    tb = obs_ref.shape[0]
    # Static 2x unroll over half-tiles: two independent compute chains let the
    # LLO scheduler overlap MXU (dots) with VPU/EUP (relu/tanh/exp) work.
    if tb >= 16 and tb % 16 == 0:
        bounds = ((0, tb // 2), (tb // 2, tb))
    else:
        bounds = ((0, tb),)

    # Matmul inputs in bf16 (MXU-native); no-op if obs is already bf16.
    x_all = obs_ref[...].astype(jnp.bfloat16)

    for lo, hi in bounds:
        x = x_all[lo:hi]

        # trunk: Linear -> ReLU -> Linear -> ReLU   (hidden_depth = 2)
        h1 = jnp.dot(x, w1, preferred_element_type=jnp.float32) + b1
        h1 = jnp.maximum(h1, 0.0).astype(jnp.bfloat16)
        h2 = jnp.dot(h1, w2, preferred_element_type=jnp.float32) + b2
        h2 = jnp.maximum(h2, 0.0).astype(jnp.bfloat16)

        # fused head: [mu | log_std]; torch's .chunk(2, -1) is a free lane slice
        head = jnp.dot(h2, w3, preferred_element_type=jnp.float32) + b3
        mu = head[:, :action_dim]
        log_std = head[:, action_dim:]

        # log_std squash + rescale into [LOG_STD_MIN, LOG_STD_MAX]; std = exp
        log_std = jnp.tanh(log_std)
        log_std = LOG_STD_MIN + 0.5 * (LOG_STD_MAX - LOG_STD_MIN) * (log_std + 1.0)
        std = jnp.exp(log_std)

        # Write the three segments directly (no concatenate / VMEM temp).
        # Lanes >= 3*action_dim of the lane-dense tile are padding; the wrapper
        # slices them off (padded batch rows likewise — never reduce over them).
        out_ref[lo:hi, 0:action_dim] = mu
        out_ref[lo:hi, action_dim:2 * action_dim] = std
        out_ref[lo:hi, 2 * action_dim:3 * action_dim] = jnp.tanh(mu)


def _round_up(x, m):
    return ((x + m - 1) // m) * m


def _choose_tb(batch):
    """Batch tile.

    This tiny MLP is latency/overhead bound (~0.35us per grid step), so for
    small/medium batches a single grid step (tb == batch rounded to 8) is best
    on every generation: v5e/v6e have one TensorCore, and on v7x a 2-way
    megacore split of a sub-microsecond step is at best break-even.  For large
    batches use 128-aligned tiles (256..1024 rows) chosen to minimize padding
    waste; per-tile VMEM stays ~1 MiB even at tb=1024, so VMEM is never the
    constraint (v7x: 64 MiB).
    """
    b8 = _round_up(max(batch, 1), 8)
    if b8 <= 1024:
        return b8
    best, best_waste = 512, _round_up(batch, 512) - batch
    for cand in (256, 384, 512, 640, 768, 896, 1024):
        waste = _round_up(batch, cand) - batch
        if waste < best_waste:
            best, best_waste = cand, waste
    return best


@functools.partial(jax.jit, static_argnames=("tb",))
def stochastic_actor_forward_packed(obs, params, tb=None):
    """Returns the packed slab (B, 3*action_dim) = [mu | std | tanh(mu)]."""
    w1, b1, w2, b2, w3, b3 = params
    B, state_dim = obs.shape
    hidden_dim = w1.shape[1]
    action_dim = w3.shape[1] // 2
    out_cols = 3 * action_dim
    out_cols_pad = _round_up(out_cols, 128)   # lane-dense output slab

    if tb is None:
        tb = _choose_tb(B)
    b_pad = _round_up(B, tb)                  # <=7 rows waste for B <= 1024
    if b_pad != B:
        obs = jnp.pad(obs, ((0, b_pad - B), (0, 0)))
    grid = (b_pad // tb,)

    obs_spec = pl.BlockSpec((tb, state_dim), lambda i: (i, 0))
    out_spec = pl.BlockSpec((tb, out_cols_pad), lambda i: (i, 0))

    def full(arr):
        shape = arr.shape
        return pl.BlockSpec(shape, lambda i: (0,) * len(shape))

    # VMEM budget: pipeline double-buffers inputs/outputs (counted once here),
    # plus activation scratch; cap at 48 MiB to leave headroom under v7x's
    # 64 MiB physical VMEM.
    def nbytes(a):
        return a.size * a.dtype.itemsize

    weight_bytes = sum(nbytes(a) for a in (w1, b1, w2, b2, w3, b3))
    io_bytes = tb * state_dim * obs.dtype.itemsize + tb * out_cols_pad * 4
    act_bytes = 6 * tb * max(hidden_dim, 128) * 4
    est = 2 * (weight_bytes + io_bytes) + act_bytes
    vmem_limit = int(min(48 << 20, max(est + (4 << 20), 16 << 20)))

    out = pl.pallas_call(
        _actor_kernel,
        out_shape=jax.ShapeDtypeStruct((b_pad, out_cols_pad), jnp.float32),
        grid_spec=pltpu.PrefetchScalarGridSpec(
            num_scalar_prefetch=0,
            grid=grid,
            in_specs=[obs_spec, full(w1), full(b1), full(w2), full(b2),
                      full(w3), full(b3)],
            out_specs=out_spec,
        ),
        compiler_params=pltpu.CompilerParams(
            dimension_semantics=("parallel",),
            vmem_limit_bytes=vmem_limit),
    )(obs, w1, b1, w2, b2, w3, b3)

    # Single slice drops the padded batch rows and padded lanes.
    return out[:B, :out_cols]


def stochastic_actor_forward(obs, params, tb=None):
    """Convenience: (mu, std, squashed_mean) of the SquashedNormal policy.

    Perf-sensitive callers should consume the packed slab from
    `stochastic_actor_forward_packed` directly (avoids column-slice copies).
    """
    slab = stochastic_actor_forward_packed(obs, params, tb=tb)
    a = slab.shape[-1] // 3
    return slab[:, :a], slab[:, a:2 * a], slab[:, 2 * a:]


def _orthogonal_t(key, out_dim, in_dim):
    """nn.init.orthogonal_ on a PyTorch-style (out, in) weight, transposed to
    (in, out) so the kernel computes x @ W, and cast to bf16 for the MXU."""
    w = jax.nn.initializers.orthogonal()(key, (out_dim, in_dim), jnp.float32)
    return w.T.astype(jnp.bfloat16)


def init_params(key, state_dim, action_dim, hidden_dim):
    k1, k2, k3 = jax.random.split(key, 3)
    w1 = _orthogonal_t(k1, hidden_dim, state_dim)
    b1 = jnp.zeros((1, hidden_dim), jnp.float32)
    w2 = _orthogonal_t(k2, hidden_dim, hidden_dim)
    b2 = jnp.zeros((1, hidden_dim), jnp.float32)
    w3 = _orthogonal_t(k3, 2 * action_dim, hidden_dim)   # (hidden, 2A) fused head
    b3 = jnp.zeros((1, 2 * action_dim), jnp.float32)
    return (w1, b1, w2, b2, w3, b3)


def reference_forward(obs, params):
    """Pure-JAX reference using the same bf16 weights / f32 accumulation."""
    w1, b1, w2, b2, w3, b3 = params
    x = obs.astype(jnp.bfloat16)
    h1 = jnp.maximum(jnp.dot(x, w1, preferred_element_type=jnp.float32) + b1, 0.0)
    h2 = jnp.maximum(jnp.dot(h1.astype(jnp.bfloat16), w2,
                             preferred_element_type=jnp.float32) + b2, 0.0)
    head = jnp.dot(h2.astype(jnp.bfloat16), w3,
                   preferred_element_type=jnp.float32) + b3
    action_dim = w3.shape[1] // 2
    mu, log_std = head[:, :action_dim], head[:, action_dim:]
    log_std = jnp.tanh(log_std)
    log_std = LOG_STD_MIN + 0.5 * (LOG_STD_MAX - LOG_STD_MIN) * (log_std + 1.0)
    return mu, jnp.exp(log_std), jnp.tanh(mu)


if __name__ == "__main__":
    # shapes consistent with StochasticActor(state_dim, action_dim, hidden_dim,
    # hidden_depth=2)
    B, state_dim, action_dim, hidden_dim = 16, 16, 4, 32

    key = jax.random.PRNGKey(0)
    k_obs, k_obs2, k_par = jax.random.split(key, 3)
    # Producer emits bf16 obs (halves obs HBM->VMEM traffic); f32 also works.
    obs = jax.random.normal(k_obs, (B, state_dim), jnp.bfloat16)
    params = init_params(k_par, state_dim, action_dim, hidden_dim)

    mu, std, mean = stochastic_actor_forward(obs, params)
    jax.block_until_ready((mu, std, mean))

    mu_r, std_r, mean_r = reference_forward(obs, params)
    assert mu.shape == (B, action_dim)
    assert std.shape == (B, action_dim)
    assert mean.shape == (B, action_dim)
    assert jnp.allclose(mu, mu_r, atol=1e-2), "mu mismatch"
    assert jnp.allclose(std, std_r, atol=1e-2), "std mismatch"
    assert jnp.allclose(mean, mean_r, atol=1e-2), "mean mismatch"

    # ragged batch (not a multiple of 8 / 16) exercises padding + single-chain path
    B2 = 20
    obs2 = jax.random.normal(k_obs2, (B2, state_dim), jnp.bfloat16)
    mu2, std2, mean2 = stochastic_actor_forward(obs2, params)
    jax.block_until_ready((mu2, std2, mean2))
    mu2_r, std2_r, mean2_r = reference_forward(obs2, params)
    assert mu2.shape == (B2, action_dim)
    assert jnp.allclose(mu2, mu2_r, atol=1e-2), "mu mismatch (padded batch)"
    assert jnp.allclose(std2, std2_r, atol=1e-2), "std mismatch (padded batch)"
    assert jnp.allclose(mean2, mean2_r, atol=1e-2), "mean mismatch (padded batch)"

    # TODO(synk): dist.rsample()/log_prob (act, log_prob methods) need a Normal
    # sampler + tanh log-det jacobian; only the forward() distribution
    # parameters (mu, std, mean) are computed in-kernel here.
    print("KERNEL_OK")
</pallas_src>

<mosaic_0001>
module attributes {stable_mosaic.version = 11 : i64} {
  func.func @_actor_kernel(%arg0: i32, %arg1: memref<16x16xbf16, #tpu.memory_space<vmem>>, %arg2: memref<16x32xbf16, #tpu.memory_space<vmem>>, %arg3: memref<1x32xf32, #tpu.memory_space<vmem>>, %arg4: memref<32x32xbf16, #tpu.memory_space<vmem>>, %arg5: memref<1x32xf32, #tpu.memory_space<vmem>>, %arg6: memref<32x8xbf16, #tpu.memory_space<vmem>>, %arg7: memref<1x8xf32, #tpu.memory_space<vmem>>, %arg8: memref<16x128xf32, #tpu.memory_space<vmem>>) attributes {dimension_semantics = [#tpu.dimension_semantics<parallel>], iteration_bounds = array<i64: 1>, scalar_prefetch = 0 : i64, scratch_operands = 0 : i64, tpu.core_type = #tpu.core_type<tc>, window_params = [{transform_indices = @transform_0, window_bounds = array<i64: 16, 16>}, {pipeline_mode = #tpu.pipeline_mode<synchronous>, transform_indices = @transform_1, window_bounds = array<i64: 16, 32>}, {pipeline_mode = #tpu.pipeline_mode<synchronous>, transform_indices = @transform_2, window_bounds = array<i64: 1, 32>}, {pipeline_mode = #tpu.pipeline_mode<synchronous>, transform_indices = @transform_3, window_bounds = array<i64: 32, 32>}, {pipeline_mode = #tpu.pipeline_mode<synchronous>, transform_indices = @transform_4, window_bounds = array<i64: 1, 32>}, {pipeline_mode = #tpu.pipeline_mode<synchronous>, transform_indices = @transform_5, window_bounds = array<i64: 32, 8>}, {pipeline_mode = #tpu.pipeline_mode<synchronous>, transform_indices = @transform_6, window_bounds = array<i64: 1, 8>}, {transform_indices = @transform_7, window_bounds = array<i64: 16, 128>}]} {
    %c0 = arith.constant 0 : index
    %c0_0 = arith.constant 0 : index
    %0 = vector.load %arg2[%c0, %c0_0] : memref<16x32xbf16, #tpu.memory_space<vmem>>, vector<16x32xbf16>
    %c0_1 = arith.constant 0 : index
    %c0_2 = arith.constant 0 : index
    %1 = vector.load %arg3[%c0_1, %c0_2] : memref<1x32xf32, #tpu.memory_space<vmem>>, vector<1x32xf32>
    %c0_3 = arith.constant 0 : index
    %c0_4 = arith.constant 0 : index
    %2 = vector.load %arg4[%c0_3, %c0_4] : memref<32x32xbf16, #tpu.memory_space<vmem>>, vector<32x32xbf16>
    %c0_5 = arith.constant 0 : index
    %c0_6 = arith.constant 0 : index
    %3 = vector.load %arg5[%c0_5, %c0_6] : memref<1x32xf32, #tpu.memory_space<vmem>>, vector<1x32xf32>
    %c0_7 = arith.constant 0 : index
    %c0_8 = arith.constant 0 : index
    %4 = vector.load %arg6[%c0_7, %c0_8] : memref<32x8xbf16, #tpu.memory_space<vmem>>, vector<32x8xbf16>
    %c0_9 = arith.constant 0 : index
    %c0_10 = arith.constant 0 : index
    %5 = vector.load %arg7[%c0_9, %c0_10] : memref<1x8xf32, #tpu.memory_space<vmem>>, vector<1x8xf32>
    %c0_11 = arith.constant 0 : index
    %c0_12 = arith.constant 0 : index
    %6 = vector.load %arg1[%c0_11, %c0_12] : memref<16x16xbf16, #tpu.memory_space<vmem>>, vector<16x16xbf16>
    %7 = vector.extract_strided_slice %6 {offsets = [0, 0], sizes = [8, 16], strides = [1, 1]} : vector<16x16xbf16> to vector<8x16xbf16>
    %cst = arith.constant dense<0.000000e+00> : vector<8x32xf32>
    %8 = tpu.matmul %7, %0, %cst {dimension_numbers = #tpu.dot_dimension_numbers<[1], [0], [0], [1], [0, 0, 1, 1], [], []>} : vector<8x16xbf16>, vector<16x32xbf16>, vector<8x32xf32> -> vector<8x32xf32>
    %9 = vector.broadcast %1 : vector<1x32xf32> to vector<8x32xf32>
    %10 = arith.addf %8, %9 : vector<8x32xf32>
    %cst_13 = arith.constant 0.000000e+00 : f32
    %11 = vector.broadcast %cst_13 : f32 to vector<8x32xf32>
    %12 = arith.maximumf %10, %11 : vector<8x32xf32>
    %13 = arith.truncf %12 : vector<8x32xf32> to vector<8x32xbf16>
    %cst_14 = arith.constant dense<0.000000e+00> : vector<8x32xf32>
    %14 = tpu.matmul %13, %2, %cst_14 {dimension_numbers = #tpu.dot_dimension_numbers<[1], [0], [0], [1], [0, 0, 1, 1], [], []>} : vector<8x32xbf16>, vector<32x32xbf16>, vector<8x32xf32> -> vector<8x32xf32>
    %15 = vector.broadcast %3 : vector<1x32xf32> to vector<8x32xf32>
    %16 = arith.addf %14, %15 : vector<8x32xf32>
    %cst_15 = arith.constant 0.000000e+00 : f32
    %17 = vector.broadcast %cst_15 : f32 to vector<8x32xf32>
    %18 = arith.maximumf %16, %17 : vector<8x32xf32>
    %19 = arith.truncf %18 : vector<8x32xf32> to vector<8x32xbf16>
    %cst_16 = arith.constant dense<0.000000e+00> : vector<8x8xf32>
    %20 = tpu.matmul %19, %4, %cst_16 {dimension_numbers = #tpu.dot_dimension_numbers<[1], [0], [0], [1], [0, 0, 1, 1], [], []>} : vector<8x32xbf16>, vector<32x8xbf16>, vector<8x8xf32> -> vector<8x8xf32>
    %21 = vector.broadcast %5 : vector<1x8xf32> to vector<8x8xf32>
    %22 = arith.addf %20, %21 : vector<8x8xf32>
    %23 = vector.extract_strided_slice %22 {offsets = [0, 0], sizes = [8, 4], strides = [1, 1]} : vector<8x8xf32> to vector<8x4xf32>
    %24 = vector.extract_strided_slice %22 {offsets = [0, 4], sizes = [8, 4], strides = [1, 1]} : vector<8x8xf32> to vector<8x4xf32>
    %25 = math.tanh %24 : vector<8x4xf32>
    %cst_17 = arith.constant 1.000000e+00 : f32
    %26 = vector.broadcast %cst_17 : f32 to vector<8x4xf32>
    %27 = arith.addf %25, %26 : vector<8x4xf32>
    %cst_18 = arith.constant 3.500000e+00 : f32
    %28 = vector.broadcast %cst_18 : f32 to vector<8x4xf32>
    %29 = arith.mulf %28, %27 : vector<8x4xf32>
    %cst_19 = arith.constant -5.000000e+00 : f32
    %30 = vector.broadcast %cst_19 : f32 to vector<8x4xf32>
    %31 = arith.addf %30, %29 : vector<8x4xf32>
    %32 = math.exp %31 : vector<8x4xf32>
    %c0_20 = arith.constant 0 : index
    %c0_21 = arith.constant 0 : index
    %33 = vector.load %arg8[%c0_20, %c0_21] : memref<16x128xf32, #tpu.memory_space<vmem>>, vector<8x4xf32>
    tpu.vector_store %arg8[%c0_20, %c0_21], %23 {strides = array<i32>} : memref<16x128xf32, #tpu.memory_space<vmem>>, vector<8x4xf32>,
    %c0_22 = arith.constant 0 : index
    %c4 = arith.constant 4 : index
    %34 = vector.load %arg8[%c0_22, %c4] : memref<16x128xf32, #tpu.memory_space<vmem>>, vector<8x4xf32>
    tpu.vector_store %arg8[%c0_22, %c4], %32 {strides = array<i32>} : memref<16x128xf32, #tpu.memory_space<vmem>>, vector<8x4xf32>,
    %35 = math.tanh %23 : vector<8x4xf32>
    %c0_23 = arith.constant 0 : index
    %c8 = arith.constant 8 : index
    %36 = vector.load %arg8[%c0_23, %c8] : memref<16x128xf32, #tpu.memory_space<vmem>>, vector<8x4xf32>
    tpu.vector_store %arg8[%c0_23, %c8], %35 {strides = array<i32>} : memref<16x128xf32, #tpu.memory_space<vmem>>, vector<8x4xf32>,
    %37 = vector.extract_strided_slice %6 {offsets = [8, 0], sizes = [8, 16], strides = [1, 1]} : vector<16x16xbf16> to vector<8x16xbf16>
    %cst_24 = arith.constant dense<0.000000e+00> : vector<8x32xf32>
    %38 = tpu.matmul %37, %0, %cst_24 {dimension_numbers = #tpu.dot_dimension_numbers<[1], [0], [0], [1], [0, 0, 1, 1], [], []>} : vector<8x16xbf16>, vector<16x32xbf16>, vector<8x32xf32> -> vector<8x32xf32>
    %39 = vector.broadcast %1 : vector<1x32xf32> to vector<8x32xf32>
    %40 = arith.addf %38, %39 : vector<8x32xf32>
    %cst_25 = arith.constant 0.000000e+00 : f32
    %41 = vector.broadcast %cst_25 : f32 to vector<8x32xf32>
    %42 = arith.maximumf %40, %41 : vector<8x32xf32>
    %43 = arith.truncf %42 : vector<8x32xf32> to vector<8x32xbf16>
    %cst_26 = arith.constant dense<0.000000e+00> : vector<8x32xf32>
    %44 = tpu.matmul %43, %2, %cst_26 {dimension_numbers = #tpu.dot_dimension_numbers<[1], [0], [0], [1], [0, 0, 1, 1], [], []>} : vector<8x32xbf16>, vector<32x32xbf16>, vector<8x32xf32> -> vector<8x32xf32>
    %45 = vector.broadcast %3 : vector<1x32xf32> to vector<8x32xf32>
    %46 = arith.addf %44, %45 : vector<8x32xf32>
    %cst_27 = arith.constant 0.000000e+00 : f32
    %47 = vector.broadcast %cst_27 : f32 to vector<8x32xf32>
    %48 = arith.maximumf %46, %47 : vector<8x32xf32>
    %49 = arith.truncf %48 : vector<8x32xf32> to vector<8x32xbf16>
    %cst_28 = arith.constant dense<0.000000e+00> : vector<8x8xf32>
    %50 = tpu.matmul %49, %4, %cst_28 {dimension_numbers = #tpu.dot_dimension_numbers<[1], [0], [0], [1], [0, 0, 1, 1], [], []>} : vector<8x32xbf16>, vector<32x8xbf16>, vector<8x8xf32> -> vector<8x8xf32>
    %51 = vector.broadcast %5 : vector<1x8xf32> to vector<8x8xf32>
    %52 = arith.addf %50, %51 : vector<8x8xf32>
    %53 = vector.extract_strided_slice %52 {offsets = [0, 0], sizes = [8, 4], strides = [1, 1]} : vector<8x8xf32> to vector<8x4xf32>
    %54 = vector.extract_strided_slice %52 {offsets = [0, 4], sizes = [8, 4], strides = [1, 1]} : vector<8x8xf32> to vector<8x4xf32>
    %55 = math.tanh %54 : vector<8x4xf32>
    %cst_29 = arith.constant 1.000000e+00 : f32
    %56 = vector.broadcast %cst_29 : f32 to vector<8x4xf32>
    %57 = arith.addf %55, %56 : vector<8x4xf32>
    %cst_30 = arith.constant 3.500000e+00 : f32
    %58 = vector.broadcast %cst_30 : f32 to vector<8x4xf32>
    %59 = arith.mulf %58, %57 : vector<8x4xf32>
    %cst_31 = arith.constant -5.000000e+00 : f32
    %60 = vector.broadcast %cst_31 : f32 to vector<8x4xf32>
    %61 = arith.addf %60, %59 : vector<8x4xf32>
    %62 = math.exp %61 : vector<8x4xf32>
    %c8_32 = arith.constant 8 : index
    %c0_33 = arith.constant 0 : index
    %63 = vector.load %arg8[%c8_32, %c0_33] : memref<16x128xf32, #tpu.memory_space<vmem>>, vector<8x4xf32>
    tpu.vector_store %arg8[%c8_32, %c0_33], %53 {strides = array<i32>} : memref<16x128xf32, #tpu.memory_space<vmem>>, vector<8x4xf32>,
    %c8_34 = arith.constant 8 : index
    %c4_35 = arith.constant 4 : index
    %64 = vector.load %arg8[%c8_34, %c4_35] : memref<16x128xf32, #tpu.memory_space<vmem>>, vector<8x4xf32>
    tpu.vector_store %arg8[%c8_34, %c4_35], %62 {strides = array<i32>} : memref<16x128xf32, #tpu.memory_space<vmem>>, vector<8x4xf32>,
    %65 = math.tanh %53 : vector<8x4xf32>
    %c8_36 = arith.constant 8 : index
    %c8_37 = arith.constant 8 : index
    %66 = vector.load %arg8[%c8_36, %c8_37] : memref<16x128xf32, #tpu.memory_space<vmem>>, vector<8x4xf32>
    tpu.vector_store %arg8[%c8_36, %c8_37], %65 {strides = array<i32>} : memref<16x128xf32, #tpu.memory_space<vmem>>, vector<8x4xf32>,
    return
  }
  func.func @transform_0(%arg0: i32) -> (i32, i32) {
    %c0_i32 = arith.constant 0 : i32
    %c0_i32_0 = arith.constant 0 : i32
    return %arg0, %c0_i32 : i32, i32
  }
  func.func @transform_1(%arg0: i32) -> (i32, i32) {
    %c0_i32 = arith.constant 0 : i32
    %c0_i32_0 = arith.constant 0 : i32
    %c0_i32_1 = arith.constant 0 : i32
    return %c0_i32, %c0_i32_0 : i32, i32
  }
  func.func @transform_2(%arg0: i32) -> (i32, i32) {
    %c0_i32 = arith.constant 0 : i32
    %c0_i32_0 = arith.constant 0 : i32
    %c0_i32_1 = arith.constant 0 : i32
    return %c0_i32, %c0_i32_0 : i32, i32
  }
  func.func @transform_3(%arg0: i32) -> (i32, i32) {
    %c0_i32 = arith.constant 0 : i32
    %c0_i32_0 = arith.constant 0 : i32
    %c0_i32_1 = arith.constant 0 : i32
    return %c0_i32, %c0_i32_0 : i32, i32
  }
  func.func @transform_4(%arg0: i32) -> (i32, i32) {
    %c0_i32 = arith.constant 0 : i32
    %c0_i32_0 = arith.constant 0 : i32
    %c0_i32_1 = arith.constant 0 : i32
    return %c0_i32, %c0_i32_0 : i32, i32
  }
  func.func @transform_5(%arg0: i32) -> (i32, i32) {
    %c0_i32 = arith.constant 0 : i32
    %c0_i32_0 = arith.constant 0 : i32
    %c0_i32_1 = arith.constant 0 : i32
    return %c0_i32, %c0_i32_0 : i32, i32
  }
  func.func @transform_6(%arg0: i32) -> (i32, i32) {
    %c0_i32 = arith.constant 0 : i32
    %c0_i32_0 = arith.constant 0 : i32
    %c0_i32_1 = arith.constant 0 : i32
    return %c0_i32, %c0_i32_0 : i32, i32
  }
  func.func @transform_7(%arg0: i32) -> (i32, i32) {
    %c0_i32 = arith.constant 0 : i32
    %c0_i32_0 = arith.constant 0 : i32
    return %arg0, %c0_i32 : i32, i32
  }
}

</mosaic_0001>

<llo_original>
// kernel: stochastic_actor_forward_packed.1
$region0: #{stochastic_actor_forward_packed.1}
  #allocation0 [shape = 'u32[]', space=smem, size = 0x4, offset = 0x4, fixed_abs, tag = 'smem constant byte address 0x4 - core index']
  #allocation1 [shape = 'u32[144,128]{1,0:T(1,128)}', space=vmem, size = 0x12000, scoped, tag = 'internal scratch']
  %s0 = inlined_call_operand.vmem [shape: bf16[16,16], index: 0, kind: input, shape index: {}]
  %s1 = inlined_call_operand.hbm [shape: bf16[16,32], index: 1, kind: input, shape index: {}]
  %s2 = inlined_call_operand.vmem [shape: f32[1,32], index: 2, kind: input, shape index: {}]
  %s3 = inlined_call_operand.vmem [shape: bf16[32,32], index: 3, kind: input, shape index: {}]
  %s4 = inlined_call_operand.hbm [shape: f32[1,32], index: 4, kind: input, shape index: {}]
  %s5 = inlined_call_operand.vmem [shape: bf16[32,8], index: 5, kind: input, shape index: {}]
  %s6 = inlined_call_operand.vmem [shape: f32[1,8], index: 6, kind: input, shape index: {}]
  %s7 = inlined_call_operand.hbm [shape: f32[16,128], index: 7, kind: output, shape index: {}]
  %s8 = sld [smem:[#allocation0]]
  $region46: #{stochastic_actor_forward_packed.1} parent=0
    _
  %s10 = ssub.s32 1, %s8
  %s11 = scalar_select 0, %s10, %s8
  $region1: #{stochastic_actor_forward_packed.1} parent=0
    #allocation2 [shape = 'u8[4096]{0}', space=vmem, size = 0x1000, scoped, tag = 'input window, operand 1, single buffered']
    #allocation3 [shape = 's32[1]{0}', space=sflag, size = 0x4, scoped, tag = 'scoped memory for stochastic_actor_forward_packed.1']
    #allocation4 [shape = 's32[1]{0}', space=sflag, size = 0x4, scoped, tag = 'scoped memory for stochastic_actor_forward_packed.1']
    #allocation5 [shape = 'u8[512]{0}', space=vmem, size = 0x400, scoped, tag = 'input window, operand 4, single buffered']
    #allocation6 [shape = 's32[1]{0}', space=sflag, size = 0x4, scoped, tag = 'scoped memory for stochastic_actor_forward_packed.1']
    #allocation7 [shape = 'u8[8192]{0}', space=vmem, size = 0x2000, scoped, tag = 'output window, operand 0, single buffered']
    %12 = vsyncpa [#allocation3], 0
    %13 = vsyncpa [#allocation6], 0
    %14 = vsyncpa [#allocation4], 0
    // Predicated region
    $region2: #{stochastic_actor_forward_packed.1} parent=1 // pred_check
      _
    $region3: #{stochastic_actor_forward_packed.1} parent=1 // pred_check_branch
      %16 = sbr.rel (0) target = $region5
    $region4: #{stochastic_actor_forward_packed.1} parent=1 // pred_region
      _
    $region5: #{stochastic_actor_forward_packed.1} parent=1 // pred_fallthru
      _
    // Predicated region
    $region6: #{stochastic_actor_forward_packed.1} parent=1 // pred_check
      _
    $region7: #{stochastic_actor_forward_packed.1} parent=1 // pred_check_branch
      %18 = sbr.rel (0) target = $region9
    $region8: #{stochastic_actor_forward_packed.1} parent=1 // pred_region
      %s20 = ssub.s32 128, 128
      %21 = vsyncadd [#allocation3], %s20
      %s22 = sshll.u32 [#allocation2], 4
      %s23 = int_to_ptr.vmem [resolvable:$true] %s22
      %28 = dma.hbm_to_vmem [thread:$0]  %s1, 128, %s23, [#allocation3], 64, 64, 4
    $region9: #{stochastic_actor_forward_packed.1} parent=1 // pred_fallthru
      _
    // Predicated region
    $region10: #{stochastic_actor_forward_packed.1} parent=1 // pred_check
      _
    $region11: #{stochastic_actor_forward_packed.1} parent=1 // pred_check_branch
      %30 = sbr.rel (0) target = $region13
    $region12: #{stochastic_actor_forward_packed.1} parent=1 // pred_region
      _
    $region13: #{stochastic_actor_forward_packed.1} parent=1 // pred_fallthru
      _
    // Predicated region
    $region14: #{stochastic_actor_forward_packed.1} parent=1 // pred_check
      _
    $region15: #{stochastic_actor_forward_packed.1} parent=1 // pred_check_branch
      %32 = sbr.rel (0) target = $region17
    $region16: #{stochastic_actor_forward_packed.1} parent=1 // pred_region
      _
    $region17: #{stochastic_actor_forward_packed.1} parent=1 // pred_fallthru
      _
    // Predicated region
    $region18: #{stochastic_actor_forward_packed.1} parent=1 // pred_check
      _
    $region19: #{stochastic_actor_forward_packed.1} parent=1 // pred_check_branch
      %34 = sbr.rel (0) target = $region21
    $region20: #{stochastic_actor_forward_packed.1} parent=1 // pred_region
      %s36 = ssub.s32 16, 16
      %37 = vsyncadd [#allocation6], %s36
      %s39 = sshll.u32 [#allocation5], 4
      %s40 = int_to_ptr.vmem [resolvable:$true] %s39
      %42 = dma.hbm_to_vmem [thread:$0]  %s4, 16, %s40, [#allocation6]
    $region21: #{stochastic_actor_forward_packed.1} parent=1 // pred_fallthru
      _
    // Predicated region
    $region22: #{stochastic_actor_forward_packed.1} parent=1 // pred_check
      _
    $region23: #{stochastic_actor_forward_packed.1} parent=1 // pred_check_branch
      %44 = sbr.rel (0) target = $region25
    $region24: #{stochastic_actor_forward_packed.1} parent=1 // pred_region
      _
    $region25: #{stochastic_actor_forward_packed.1} parent=1 // pred_fallthru
      _
    // Predicated region
    $region26: #{stochastic_actor_forward_packed.1} parent=1 // pred_check
      _
    $region27: #{stochastic_actor_forward_packed.1} parent=1 // pred_check_branch
      %46 = sbr.rel (0) target = $region29
    $region28: #{stochastic_actor_forward_packed.1} parent=1 // pred_region
      _
    $region29: #{stochastic_actor_forward_packed.1} parent=1 // pred_fallthru
      _
    // Predicated region
    $region30: #{stochastic_actor_forward_packed.1} parent=1 // pred_check
      _
    $region31: #{stochastic_actor_forward_packed.1} parent=1 // pred_check_branch
      %48 = sbr.rel (0) target = $region33
    $region32: #{stochastic_actor_forward_packed.1} parent=1 // pred_region
      %49 = dma.done [#allocation3], 128
    $region33: #{stochastic_actor_forward_packed.1} parent=1 // pred_fallthru
      _
    // Predicated region
    $region34: #{stochastic_actor_forward_packed.1} parent=1 // pred_check
      _
    $region35: #{stochastic_actor_forward_packed.1} parent=1 // pred_check_branch
      %51 = sbr.rel (0) target = $region37
    $region36: #{stochastic_actor_forward_packed.1} parent=1 // pred_region
      %52 = dma.done [#allocation6], 16
    $region37: #{stochastic_actor_forward_packed.1} parent=1 // pred_fallthru
      _
    %v54 = vld [vmem:[#allocation2] sm:$0xf]
    %v55 = vld [vmem:[#allocation2 + $0x4] sm:$0xf]
    %v56 = vld [vmem:[%s2] sm:$0x1]
    %v57 = vld [vmem:[%s3] sm:$0xf]
    %v58 = vld [vmem:[%s3 + $0x4] sm:$0xf]
    %v59 = vld [vmem:[%s3 + $0x8] sm:$0xf]
    %v60 = vld [vmem:[%s3 + $0xc] sm:$0xf]
    %v61 = vld [vmem:[#allocation5] sm:$0x1]
    %v62 = vld [vmem:[%s5] sm:$0xf]
    %v63 = vld [vmem:[%s5 + $0x4] sm:$0xf]
    %v64 = vld [vmem:[%s5 + $0x8] sm:$0xf]
    %v65 = vld [vmem:[%s5 + $0xc] sm:$0xf]
    %v66 = vld [vmem:[%s6] sm:$0x1]
    %v67 = vld [vmem:[%s0] sm:$0xf]
    %v68 = vld [vmem:[%s0 + $0x4] sm:$0xf]
    %v70 = vlaneseq
    %v71 = vshrl.u32 %v70, 7
    %v72 = vsub.s32 0, %v71
    %v73 = vrot.slane %v56, %v72
    %v77 = vunpack.c.l.b16 %v54
    %v78 = vunpack.c.l.b16 %v55
    %v79 = vpack.c.b16 %v78, %v77
    %vm81 = vcmask 130048
    %v83 = vsel %vm81, %v67, 0
    %85 = vmatprep.subr.bf16.mxu0 0
    %86 = vmatpush1.bf16.msra.mxu0 0
    %87 = vmatprep.subr.bf16.mxu0 0
    %88 = vmatpush1.bf16.msra.mxu0 0
    %89 = vmatprep.subr.bf16.mxu0 0
    %90 = vmatpush1.bf16.msra.mxu0 0
    %91 = vmatprep.subr.bf16.mxu0 0
    %92 = vmatpush1.bf16.msra.mxu0 0
    %93 = vmatprep.subr.bf16.mxu0 0
    %94 = vmatpush1.bf16.msra.mxu0 0
    %95 = vmatprep.subr.bf16.mxu0 0
    %96 = vmatpush1.bf16.msra.mxu0 0
    %97 = vmatprep.subr.bf16.mxu0 0
    %98 = vmatpush1.bf16.msra.mxu0 0
    %99 = vmatprep.subr.bf16.mxu0 0
    %100 = vmatpush1.bf16.msra.mxu0 %v79
    %101 = vmatprep.subr.bf16.mxu0 0
    %102 = vmatpush2.bf16.msra.mxu0 0
    %103 = vmatprep.subr.bf16.mxu0 0
    %104 = vmatpush2.bf16.msra.mxu0 0
    %105 = vmatprep.subr.bf16.mxu0 0
    %106 = vmatpush2.bf16.msra.mxu0 0
    %107 = vmatprep.subr.bf16.mxu0 0
    %108 = vmatpush2.bf16.msra.mxu0 0
    %109 = vmatprep.subr.bf16.mxu0 0
    %110 = vmatpush2.bf16.msra.mxu0 0
    %111 = vmatprep.subr.bf16.mxu0 0
    %112 = vmatpush2.bf16.msra.mxu0 0
    %113 = vmatprep.subr.bf16.mxu0 0
    %114 = vmatpush2.bf16.msra.mxu0 0
    %115 = vmatprep.subr.bf16.mxu0 0
    %116 = vmatpush2.bf16.msra.mxu0 0
    %117 = vmatprep.mubr.bf16.mxu0 0
    %118 = vmatmul.mubr.bf16.gmra.mxu0 %v83
    %v119 = vpop.f32.mrf.mxu0
    %v120 = vadd.f32 %v73, %v119
    %v121 = vpop.f32.mrf.mxu0
    %v122 = vpop.f32.mrf.mxu0
    %v123 = vpop.f32.mrf.mxu0
    %124 = vdwg.mxu0
    %v125 = vmax.f32 %v120, 0.0
    %v126 = vpack.c.bf16 %v125, %v125
    %v128 = vlaneseq
    %v129 = vshrl.u32 %v128, 7
    %v130 = vsub.s32 0, %v129
    %v131 = vrot.slane %v61, %v130
    %v137 = vunpack.c.l.b16 %v57
    %v138 = vunpack.c.l.b16 %v58
    %v139 = vunpack.c.l.b16 %v59
    %v140 = vunpack.c.l.b16 %v60
    %v141 = vpack.c.b16 %v138, %v137
    %v142 = vpack.c.b16 %v140, %v139
    %vm145 = vcmask 261120
    %v147 = vsel %vm145, %v126, 0
    %149 = vmatprep.subr.bf16.mxu0 0
    %150 = vmatpush1.bf16.msra.mxu0 0
    %151 = vmatprep.subr.bf16.mxu0 0
    %152 = vmatpush1.bf16.msra.mxu0 0
    %153 = vmatprep.subr.bf16.mxu0 0
    %154 = vmatpush1.bf16.msra.mxu0 0
    %155 = vmatprep.subr.bf16.mxu0 0
    %156 = vmatpush1.bf16.msra.mxu0 0
    %157 = vmatprep.subr.bf16.mxu0 0
    %158 = vmatpush1.bf16.msra.mxu0 0
    %159 = vmatprep.subr.bf16.mxu0 0
    %160 = vmatpush1.bf16.msra.mxu0 0
    %161 = vmatprep.subr.bf16.mxu0 0
    %162 = vmatpush1.bf16.msra.mxu0 %v142
    %163 = vmatprep.subr.bf16.mxu0 0
    %164 = vmatpush1.bf16.msra.mxu0 %v141
    %165 = vmatprep.subr.bf16.mxu0 0
    %166 = vmatpush2.bf16.msra.mxu0 0
    %167 = vmatprep.subr.bf16.mxu0 0
    %168 = vmatpush2.bf16.msra.mxu0 0
    %169 = vmatprep.subr.bf16.mxu0 0
    %170 = vmatpush2.bf16.msra.mxu0 0
    %171 = vmatprep.subr.bf16.mxu0 0
    %172 = vmatpush2.bf16.msra.mxu0 0
    %173 = vmatprep.subr.bf16.mxu0 0
    %174 = vmatpush2.bf16.msra.mxu0 0
    %175 = vmatprep.subr.bf16.mxu0 0
    %176 = vmatpush2.bf16.msra.mxu0 0
    %177 = vmatprep.subr.bf16.mxu0 0
    %178 = vmatpush2.bf16.msra.mxu0 0
    %179 = vmatprep.subr.bf16.mxu0 0
    %180 = vmatpush2.bf16.msra.mxu0 0
    %181 = vmatprep.mubr.bf16.mxu0 0
    %182 = vmatmul.mubr.bf16.gmra.mxu0 %v147
    %v183 = vpop.f32.mrf.mxu0
    %v184 = vadd.f32 %v131, %v183
    %v185 = vpop.f32.mrf.mxu0
    %v186 = vpop.f32.mrf.mxu0
    %v187 = vpop.f32.mrf.mxu0
    %188 = vdwg.mxu0
    %v189 = vmax.f32 %v184, 0.0
    %v190 = vpack.c.bf16 %v189, %v189
    %v192 = vlaneseq
    %v193 = vshrl.u32 %v192, 7
    %v194 = vsub.s32 0, %v193
    %v195 = vrot.slane %v66, %v194
    %v201 = vunpack.c.l.b16 %v62
    %v202 = vunpack.c.l.b16 %v63
    %v203 = vunpack.c.l.b16 %v64
    %v204 = vunpack.c.l.b16 %v65
    %v205 = vpack.c.b16 %v202, %v201
    %v206 = vpack.c.b16 %v204, %v203
    %v210 = vsel %vm145, %v190, 0
    %212 = vmatprep.subr.bf16.mxu0 0
    %213 = vmatpush1.bf16.msra.mxu0 0
    %214 = vmatprep.subr.bf16.mxu0 0
    %215 = vmatpush1.bf16.msra.mxu0 0
    %216 = vmatprep.subr.bf16.mxu0 0
    %217 = vmatpush1.bf16.msra.mxu0 0
    %218 = vmatprep.subr.bf16.mxu0 0
    %219 = vmatpush1.bf16.msra.mxu0 0
    %220 = vmatprep.subr.bf16.mxu0 0
    %221 = vmatpush1.bf16.msra.mxu0 0
    %222 = vmatprep.subr.bf16.mxu0 0
    %223 = vmatpush1.bf16.msra.mxu0 0
    %224 = vmatprep.subr.bf16.mxu0 0
    %225 = vmatpush1.bf16.msra.mxu0 %v206
    %226 = vmatprep.subr.bf16.mxu0 0
    %227 = vmatpush1.bf16.msra.mxu0 %v205
    %228 = vmatprep.subr.bf16.mxu0 0
    %229 = vmatpush2.bf16.msra.mxu0 0
    %230 = vmatprep.subr.bf16.mxu0 0
    %231 = vmatpush2.bf16.msra.mxu0 0
    %232 = vmatprep.subr.bf16.mxu0 0
    %233 = vmatpush2.bf16.msra.mxu0 0
    %234 = vmatprep.subr.bf16.mxu0 0
    %235 = vmatpush2.bf16.msra.mxu0 0
    %236 = vmatprep.subr.bf16.mxu0 0
    %237 = vmatpush2.bf16.msra.mxu0 0
    %238 = vmatprep.subr.bf16.mxu0 0
    %239 = vmatpush2.bf16.msra.mxu0 0
    %240 = vmatprep.subr.bf16.mxu0 0
    %241 = vmatpush2.bf16.msra.mxu0 0
    %242 = vmatprep.subr.bf16.mxu0 0
    %243 = vmatpush2.bf16.msra.mxu0 0
    %244 = vmatprep.mubr.bf16.mxu0 0
    %245 = vmatmul.mubr.bf16.gmra.mxu0 %v210
    %v246 = vpop.f32.mrf.mxu0
    %v247 = vadd.f32 %v195, %v246
    %v248 = vpop.f32.mrf.mxu0
    %v249 = vpop.f32.mrf.mxu0
    %v250 = vpop.f32.mrf.mxu0
    %251 = vdwg.mxu0
    %v252 = vtanh.pop %v247
    %v253 = vadd.f32 %v252, 1.0
    %v254 = vmul.f32 %v253, 3.5
    %v255 = vadd.f32 %v254, -5.0
    %v256 = vmul.f32 %v255, 1.442695
    %v257 = vpow.pop %v256
    %vm258 = vcmask 31744
    %259 = vst.msk [vmem:[#allocation7] sm:$0xff] %vm258, %v247
    %vm260 = vcmask 64544
    %261 = vst.msk [vmem:[#allocation7] sm:$0xff] %vm260, %v257
    %263 = vrot.lane.b32.xlu0 %v252, 8
    %v264 = vpop.permute.xlu0 %263
    %vm266 = vcmask 97344
    %267 = vst.msk [vmem:[#allocation7] sm:$0xff] %vm266, %v264
    %v269 = vsel %vm81, %v68, 0
    %271 = vmatprep.subr.bf16.mxu0 0
    %272 = vmatpush1.bf16.msra.mxu0 0
    %273 = vmatprep.subr.bf16.mxu0 0
    %274 = vmatpush1.bf16.msra.mxu0 0
    %275 = vmatprep.subr.bf16.mxu0 0
    %276 = vmatpush1.bf16.msra.mxu0 0
    %277 = vmatprep.subr.bf16.mxu0 0
    %278 = vmatpush1.bf16.msra.mxu0 0
    %279 = vmatprep.subr.bf16.mxu0 0
    %280 = vmatpush1.bf16.msra.mxu0 0
    %281 = vmatprep.subr.bf16.mxu0 0
    %282 = vmatpush1.bf16.msra.mxu0 0
    %283 = vmatprep.subr.bf16.mxu0 0
    %284 = vmatpush1.bf16.msra.mxu0 0
    %285 = vmatprep.subr.bf16.mxu0 0
    %286 = vmatpush1.bf16.msra.mxu0 %v79
    %287 = vmatprep.subr.bf16.mxu0 0
    %288 = vmatpush2.bf16.msra.mxu0 0
    %289 = vmatprep.subr.bf16.mxu0 0
    %290 = vmatpush2.bf16.msra.mxu0 0
    %291 = vmatprep.subr.bf16.mxu0 0
    %292 = vmatpush2.bf16.msra.mxu0 0
    %293 = vmatprep.subr.bf16.mxu0 0
    %294 = vmatpush2.bf16.msra.mxu0 0
    %295 = vmatprep.subr.bf16.mxu0 0
    %296 = vmatpush2.bf16.msra.mxu0 0
    %297 = vmatprep.subr.bf16.mxu0 0
    %298 = vmatpush2.bf16.msra.mxu0 0
    %299 = vmatprep.subr.bf16.mxu0 0
    %300 = vmatpush2.bf16.msra.mxu0 0
    %301 = vmatprep.subr.bf16.mxu0 0
    %302 = vmatpush2.bf16.msra.mxu0 0
    %303 = vmatprep.mubr.bf16.mxu0 0
    %304 = vmatmul.mubr.bf16.gmra.mxu0 %v269
    %v305 = vpop.f32.mrf.mxu0
    %v306 = vadd.f32 %v73, %v305
    %v307 = vpop.f32.mrf.mxu0
    %v308 = vpop.f32.mrf.mxu0
    %v309 = vpop.f32.mrf.mxu0
    %310 = vdwg.mxu0
    %v311 = vmax.f32 %v306, 0.0
    %v312 = vpack.c.bf16 %v311, %v311
    %v314 = vsel %vm145, %v312, 0
    %316 = vmatprep.subr.bf16.mxu0 0
    %317 = vmatpush1.bf16.msra.mxu0 0
    %318 = vmatprep.subr.bf16.mxu0 0
    %319 = vmatpush1.bf16.msra.mxu0 0
    %320 = vmatprep.subr.bf16.mxu0 0
    %321 = vmatpush1.bf16.msra.mxu0 0
    %322 = vmatprep.subr.bf16.mxu0 0
    %323 = vmatpush1.bf16.msra.mxu0 0
    %324 = vmatprep.subr.bf16.mxu0 0
    %325 = vmatpush1.bf16.msra.mxu0 0
    %326 = vmatprep.subr.bf16.mxu0 0
    %327 = vmatpush1.bf16.msra.mxu0 0
    %328 = vmatprep.subr.bf16.mxu0 0
    %329 = vmatpush1.bf16.msra.mxu0 %v142
    %330 = vmatprep.subr.bf16.mxu0 0
    %331 = vmatpush1.bf16.msra.mxu0 %v141
    %332 = vmatprep.subr.bf16.mxu0 0
    %333 = vmatpush2.bf16.msra.mxu0 0
    %334 = vmatprep.subr.bf16.mxu0 0
    %335 = vmatpush2.bf16.msra.mxu0 0
    %336 = vmatprep.subr.bf16.mxu0 0
    %337 = vmatpush2.bf16.msra.mxu0 0
    %338 = vmatprep.subr.bf16.mxu0 0
    %339 = vmatpush2.bf16.msra.mxu0 0
    %340 = vmatprep.subr.bf16.mxu0 0
    %341 = vmatpush2.bf16.msra.mxu0 0
    %342 = vmatprep.subr.bf16.mxu0 0
    %343 = vmatpush2.bf16.msra.mxu0 0
    %344 = vmatprep.subr.bf16.mxu0 0
    %345 = vmatpush2.bf16.msra.mxu0 0
    %346 = vmatprep.subr.bf16.mxu0 0
    %347 = vmatpush2.bf16.msra.mxu0 0
    %348 = vmatprep.mubr.bf16.mxu0 0
    %349 = vmatmul.mubr.bf16.gmra.mxu0 %v314
    %v350 = vpop.f32.mrf.mxu0
    %v351 = vadd.f32 %v131, %v350
    %v352 = vpop.f32.mrf.mxu0
    %v353 = vpop.f32.mrf.mxu0
    %v354 = vpop.f32.mrf.mxu0
    %355 = vdwg.mxu0
    %v356 = vmax.f32 %v351, 0.0
    %v357 = vpack.c.bf16 %v356, %v356
    %v359 = vsel %vm145, %v357, 0
    %361 = vmatprep.subr.bf16.mxu0 0
    %362 = vmatpush1.bf16.msra.mxu0 0
    %363 = vmatprep.subr.bf16.mxu0 0
    %364 = vmatpush1.bf16.msra.mxu0 0
    %365 = vmatprep.subr.bf16.mxu0 0
    %366 = vmatpush1.bf16.msra.mxu0 0
    %367 = vmatprep.subr.bf16.mxu0 0
    %368 = vmatpush1.bf16.msra.mxu0 0
    %369 = vmatprep.subr.bf16.mxu0 0
    %370 = vmatpush1.bf16.msra.mxu0 0
    %371 = vmatprep.subr.bf16.mxu0 0
    %372 = vmatpush1.bf16.msra.mxu0 0
    %373 = vmatprep.subr.bf16.mxu0 0
    %374 = vmatpush1.bf16.msra.mxu0 %v206
    %375 = vmatprep.subr.bf16.mxu0 0
    %376 = vmatpush1.bf16.msra.mxu0 %v205
    %377 = vmatprep.subr.bf16.mxu0 0
    %378 = vmatpush2.bf16.msra.mxu0 0
    %379 = vmatprep.subr.bf16.mxu0 0
    %380 = vmatpush2.bf16.msra.mxu0 0
    %381 = vmatprep.subr.bf16.mxu0 0
    %382 = vmatpush2.bf16.msra.mxu0 0
    %383 = vmatprep.subr.bf16.mxu0 0
    %384 = vmatpush2.bf16.msra.mxu0 0
    %385 = vmatprep.subr.bf16.mxu0 0
    %386 = vmatpush2.bf16.msra.mxu0 0
    %387 = vmatprep.subr.bf16.mxu0 0
    %388 = vmatpush2.bf16.msra.mxu0 0
    %389 = vmatprep.subr.bf16.mxu0 0
    %390 = vmatpush2.bf16.msra.mxu0 0
    %391 = vmatprep.subr.bf16.mxu0 0
    %392 = vmatpush2.bf16.msra.mxu0 0
    %393 = vmatprep.mubr.bf16.mxu0 0
    %394 = vmatmul.mubr.bf16.gmra.mxu0 %v359
    %v395 = vpop.f32.mrf.mxu0
    %v396 = vadd.f32 %v195, %v395
    %v397 = vpop.f32.mrf.mxu0
    %v398 = vpop.f32.mrf.mxu0
    %v399 = vpop.f32.mrf.mxu0
    %400 = vdwg.mxu0
    %v401 = vtanh.pop %v396
    %v402 = vadd.f32 %v401, 1.0
    %v403 = vmul.f32 %v402, 3.5
    %v404 = vadd.f32 %v403, -5.0
    %v405 = vmul.f32 %v404, 1.442695
    %v406 = vpow.pop %v405
    %407 = vst.msk [vmem:[#allocation7 + $0x8] sm:$0xff] %vm258, %v396
    %408 = vst.msk [vmem:[#allocation7 + $0x8] sm:$0xff] %vm260, %v406
    %410 = vrot.lane.b32.xlu0 %v401, 8
    %v411 = vpop.permute.xlu0 %410
    %413 = vst.msk [vmem:[#allocation7 + $0x8] sm:$0xff] %vm266, %v411
    // Predicated region
    $region38: #{stochastic_actor_forward_packed.1} parent=1 // pred_check
      _
    $region39: #{stochastic_actor_forward_packed.1} parent=1 // pred_check_branch
      %415 = sbr.rel (0) target = $region41
    $region40: #{stochastic_actor_forward_packed.1} parent=1 // pred_region
      %s417 = ssub.s32 256, 256
      %418 = vsyncadd [#allocation4], %s417
      %s419 = sshll.u32 [#allocation7], 4
      %s420 = int_to_ptr.vmem [resolvable:$true] %s419
      %425 = dma.vmem_to_hbm [thread:$0]  %s420, 256, %s7, [#allocation4], 128, 128, 8
    $region41: #{stochastic_actor_forward_packed.1} parent=1 // pred_fallthru
      _
    // Predicated region
    $region42: #{stochastic_actor_forward_packed.1} parent=1 // pred_check
      _
    $region43: #{stochastic_actor_forward_packed.1} parent=1 // pred_check_branch
      %427 = sbr.rel (0) target = $region45
    $region44: #{stochastic_actor_forward_packed.1} parent=1 // pred_region
      %428 = dma.done [#allocation4], 256
    $region45: #{stochastic_actor_forward_packed.1} parent=1 // pred_fallthru
      _
    %429 = vsyncpa [#allocation3], 1
    %430 = vsyncpa [#allocation6], 1
    %431 = vsyncpa [#allocation4], 1

</llo_original>
